<compile_context>
chip_gen: v6e
topology: v6e:2x2x1
jax: 0.10.0
libtpu: 0.0.40
codegen_flags: <defaults>
</compile_context>

<pallas_src>
import functools

import jax
import jax.numpy as jnp
from jax.experimental import pallas as pl
from jax.experimental.pallas import tpu as pltpu


def _round_up(x, m):
    return ((x + m - 1) // m) * m


def _attn_pool_kernel(x_ref, w1_ref, b1_ref, w2_ref, b2_ref,
                      pooled_ref, wts_ref):
    bb, s, d = x_ref.shape            # batch block, sequence, feature
    x = x_ref[...].astype(jnp.float32)            # (bb, S, D)
    x2 = x.reshape(bb * s, d)                     # merge batches into MXU rows

    # linear1 + tanh: bf16 MXU matmul (f32 accumulate), f32 elementwise.
    h = jnp.tanh(
        jnp.dot(x2.astype(jnp.bfloat16), w1_ref[...],
                preferred_element_type=jnp.float32)
        + b1_ref[...]
    )                                             # (bb*S, H) f32

    # linear2 (output width 1): VPU multiply + lane reduction instead of an
    # N=1 MXU matmul.
    scores = jnp.sum(h * w2_ref[...], axis=-1, keepdims=True) + b2_ref[...]
    scores = scores.reshape(bb, s, 1)             # (bb, S, 1)

    # Softmax over the sequence axis (dim=1 of the torch module), per batch.
    m = jnp.max(scores, axis=1, keepdims=True)    # (bb, 1, 1)
    e = jnp.exp(scores - m)                       # (bb, S, 1)
    denom = jnp.sum(e, axis=1, keepdims=True)     # (bb, 1, 1)
    w = e * pl.reciprocal(denom, approx=True)     # (bb, S, 1)

    # pooled[b] = sum_s w[b, s] * x[b, s, :]  — broadcast multiply + sublane
    # reduction per batch (avoids an M=1 MXU matmul per batch).
    pooled = jnp.sum(w * x, axis=1)               # (bb, D)

    pooled_ref[...] = pooled.astype(pooled_ref.dtype)
    wts_ref[...] = w.reshape(bb, s).astype(wts_ref.dtype)


def _choose_block_b(B, S, D, H, itemsize):
    # Fill the MXU M dimension: target ~512 rows (block_b * S) per grid step.
    block_b = _round_up(max(1, 512 // max(S, 1)), 8)
    # Keep >= 2 grid blocks when the batch allows (v7x has 2 TCs and the batch
    # grid axis is "parallel").
    if B >= 16:
        block_b = min(block_b, _round_up(pl.cdiv(B, 2), 8))
    # VMEM budget: keep x block + h intermediate comfortably under the scoped
    # VMEM default on every generation (16 MiB on v5e, 32 MiB on v6e/v7x).
    per_batch_bytes = S * D * itemsize + S * H * 4
    cap = (6 * 1024 * 1024) // max(per_batch_bytes, 1)
    cap = max(8, (cap // 8) * 8)
    block_b = min(block_b, cap)
    # Never exceed the (padded) batch; keep sublane-dense (multiple of 8).
    block_b = max(8, min(block_b, _round_up(B, 8)))
    return block_b


@functools.partial(jax.jit, static_argnames=("block_b",))
def attentive_pooling(x, w1, b1, w2, b2, block_b=None):
    """x: (B, S, D); w1: (D, H); b1: (1, H); w2: (H, 1); b2: (1, 1).

    Returns (pooled (B, D), attention weights (B, S)).
    """
    B, S, D = x.shape
    H = w1.shape[1]

    if block_b is None:
        block_b = _choose_block_b(B, S, D, H, jnp.dtype(x.dtype).itemsize)

    Bp = _round_up(B, block_b)
    if Bp != B:
        # Zero-pad the batch; padded rows produce a uniform softmax (no NaNs)
        # and are sliced away below.
        x = jnp.pad(x, ((0, Bp - B), (0, 0), (0, 0)))

    # bf16 weights for the MXU (cast once, halves w1 traffic); biases / the
    # linear2 row stay f32 since that math runs on the VPU.
    w1_bf16 = w1.astype(jnp.bfloat16)
    w2_row = w2.reshape(1, H).astype(jnp.float32)
    b1_f32 = b1.astype(jnp.float32)
    b2_f32 = b2.astype(jnp.float32)

    # TODO(synk): for very large D*H (w1 approaching the VMEM budget) add a
    # K-tiling "arbitrary" grid axis with an f32 accumulator instead of loading
    # the whole (D, H) w1 per call.
    grid_spec = pltpu.PrefetchScalarGridSpec(
        num_scalar_prefetch=0,
        grid=(Bp // block_b,),
        in_specs=[
            pl.BlockSpec((block_b, S, D), lambda i: (i, 0, 0)),   # x block
            pl.BlockSpec((D, H), lambda i: (0, 0)),               # w1 (bf16), resident
            pl.BlockSpec((1, H), lambda i: (0, 0)),               # b1
            pl.BlockSpec((1, H), lambda i: (0, 0)),               # w2 row
            pl.BlockSpec((1, 1), lambda i: (0, 0)),               # b2
        ],
        out_specs=[
            pl.BlockSpec((block_b, D), lambda i: (i, 0)),         # pooled
            pl.BlockSpec((block_b, S), lambda i: (i, 0)),         # weights
        ],
    )

    pooled, weights = pl.pallas_call(
        _attn_pool_kernel,
        grid_spec=grid_spec,
        out_shape=(
            jax.ShapeDtypeStruct((Bp, D), x.dtype),
            jax.ShapeDtypeStruct((Bp, S), x.dtype),
        ),
        compiler_params=pltpu.CompilerParams(
            dimension_semantics=("parallel",),
        ),
    )(x, w1_bf16, b1_f32, w2_row, b2_f32)

    return pooled[:B], weights[:B]


def _reference(x, w1, b1, w2, b2):
    h = jnp.tanh(x @ w1 + b1[None, :, :])
    scores = h @ w2 + b2[None, :, :]                   # (B, S, 1)
    weights = jax.nn.softmax(scores, axis=1)           # (B, S, 1)
    pooled = jnp.einsum("bsl,bsd->bld", weights, x)    # (B, 1, D)
    return pooled[:, 0, :], weights[:, :, 0]


if __name__ == "__main__":
    # Small shapes consistent with the module: batch=2, seq=8, input=hidden=32
    B, S, D, H = 2, 8, 32, 32
    key = jax.random.PRNGKey(0)
    kx, k1, k2, k3, k4 = jax.random.split(key, 5)

    x = jax.random.normal(kx, (B, S, D), dtype=jnp.float32)
    # nn.Linear(input_size, hidden_size) / nn.Linear(hidden_size, 1) params,
    # stored transposed for x @ W layout.
    w1 = jax.random.normal(k1, (D, H), dtype=jnp.float32) * 0.1
    b1 = jax.random.normal(k2, (1, H), dtype=jnp.float32) * 0.1
    w2 = jax.random.normal(k3, (H, 1), dtype=jnp.float32) * 0.1
    b2 = jax.random.normal(k4, (1, 1), dtype=jnp.float32) * 0.1

    pooled, weights = attentive_pooling(x, w1, b1, w2, b2)
    jax.block_until_ready((pooled, weights))

    ref_pooled, ref_weights = _reference(x, w1, b1, w2, b2)
    assert pooled.shape == (B, D) and weights.shape == (B, S)
    # bf16 MXU inputs + EUP approximate reciprocal => relaxed tolerance vs the
    # pure-f32 reference.
    assert jnp.allclose(pooled, ref_pooled, atol=2e-2, rtol=2e-2)
    assert jnp.allclose(weights, ref_weights, atol=2e-2, rtol=2e-2)
    assert jnp.allclose(jnp.sum(weights, axis=1), 1.0, atol=1e-2)

    print("KERNEL_OK")
</pallas_src>

<mosaic_0001>
module attributes {stable_mosaic.version = 11 : i64} {
  func.func @_attn_pool_kernel(%arg0: i32, %arg1: memref<8x8x32xf32, #tpu.memory_space<vmem>>, %arg2: memref<32x32xbf16, #tpu.memory_space<vmem>>, %arg3: memref<1x32xf32, #tpu.memory_space<vmem>>, %arg4: memref<1x32xf32, #tpu.memory_space<vmem>>, %arg5: memref<1x1xf32, #tpu.memory_space<vmem>>, %arg6: memref<8x32xf32, #tpu.memory_space<vmem>>, %arg7: memref<8x8xf32, #tpu.memory_space<vmem>>) attributes {dimension_semantics = [#tpu.dimension_semantics<parallel>], iteration_bounds = array<i64: 1>, scalar_prefetch = 0 : i64, scratch_operands = 0 : i64, tpu.core_type = #tpu.core_type<tc>, window_params = [{transform_indices = @transform_0, window_bounds = array<i64: 8, 8, 32>}, {pipeline_mode = #tpu.pipeline_mode<synchronous>, transform_indices = @transform_1, window_bounds = array<i64: 32, 32>}, {pipeline_mode = #tpu.pipeline_mode<synchronous>, transform_indices = @transform_2, window_bounds = array<i64: 1, 32>}, {pipeline_mode = #tpu.pipeline_mode<synchronous>, transform_indices = @transform_3, window_bounds = array<i64: 1, 32>}, {pipeline_mode = #tpu.pipeline_mode<synchronous>, transform_indices = @transform_4, window_bounds = array<i64: 1, 1>}, {transform_indices = @transform_5, window_bounds = array<i64: 8, 32>}, {transform_indices = @transform_6, window_bounds = array<i64: 8, 8>}]} {
    %c0 = arith.constant 0 : index
    %c0_0 = arith.constant 0 : index
    %c0_1 = arith.constant 0 : index
    %0 = vector.load %arg1[%c0, %c0_0, %c0_1] : memref<8x8x32xf32, #tpu.memory_space<vmem>>, vector<8x8x32xf32>
    %1 = vector.shape_cast %0 : vector<8x8x32xf32> to vector<64x32xf32>
    %2 = arith.truncf %1 : vector<64x32xf32> to vector<64x32xbf16>
    %c0_2 = arith.constant 0 : index
    %c0_3 = arith.constant 0 : index
    %3 = vector.load %arg2[%c0_2, %c0_3] : memref<32x32xbf16, #tpu.memory_space<vmem>>, vector<32x32xbf16>
    %cst = arith.constant dense<0.000000e+00> : vector<64x32xf32>
    %4 = tpu.matmul %2, %3, %cst {dimension_numbers = #tpu.dot_dimension_numbers<[1], [0], [0], [1], [0, 0, 1, 1], [], []>} : vector<64x32xbf16>, vector<32x32xbf16>, vector<64x32xf32> -> vector<64x32xf32>
    %c0_4 = arith.constant 0 : index
    %c0_5 = arith.constant 0 : index
    %5 = vector.load %arg3[%c0_4, %c0_5] : memref<1x32xf32, #tpu.memory_space<vmem>>, vector<1x32xf32>
    %6 = vector.broadcast %5 : vector<1x32xf32> to vector<64x32xf32>
    %7 = arith.addf %4, %6 : vector<64x32xf32>
    %8 = math.tanh %7 : vector<64x32xf32>
    %c0_6 = arith.constant 0 : index
    %c0_7 = arith.constant 0 : index
    %9 = vector.load %arg4[%c0_6, %c0_7] : memref<1x32xf32, #tpu.memory_space<vmem>>, vector<1x32xf32>
    %10 = vector.broadcast %9 : vector<1x32xf32> to vector<64x32xf32>
    %11 = arith.mulf %8, %10 : vector<64x32xf32>
    %cst_8 = arith.constant dense<0.000000e+00> : vector<64xf32>
    %12 = vector.multi_reduction <add>, %11, %cst_8 [1] : vector<64x32xf32> to vector<64xf32>
    %13 = vector.shape_cast %12 : vector<64xf32> to vector<64x1xf32>
    %c0_9 = arith.constant 0 : index
    %c0_10 = arith.constant 0 : index
    %14 = vector.load %arg5[%c0_9, %c0_10] : memref<1x1xf32, #tpu.memory_space<vmem>>, vector<1x1xf32>
    %15 = vector.broadcast %14 : vector<1x1xf32> to vector<64x1xf32>
    %16 = arith.addf %13, %15 : vector<64x1xf32>
    %17 = vector.shape_cast %16 : vector<64x1xf32> to vector<8x8x1xf32>
    %cst_11 = arith.constant dense<0xFF800000> : vector<8x1xf32>
    %18 = vector.multi_reduction <maximumf>, %17, %cst_11 [1] : vector<8x8x1xf32> to vector<8x1xf32>
    %19 = vector.shape_cast %18 : vector<8x1xf32> to vector<8x1x1xf32>
    %20 = vector.broadcast %19 : vector<8x1x1xf32> to vector<8x8x1xf32>
    %21 = arith.subf %17, %20 : vector<8x8x1xf32>
    %22 = math.exp %21 : vector<8x8x1xf32>
    %cst_12 = arith.constant dense<0.000000e+00> : vector<8x1xf32>
    %23 = vector.multi_reduction <add>, %22, %cst_12 [1] : vector<8x8x1xf32> to vector<8x1xf32>
    %24 = vector.shape_cast %23 : vector<8x1xf32> to vector<8x1x1xf32>
    %25 = tpu.reciprocal %24 {approx = true} : vector<8x1x1xf32> -> vector<8x1x1xf32>
    %26 = vector.broadcast %25 : vector<8x1x1xf32> to vector<8x8x1xf32>
    %27 = arith.mulf %22, %26 : vector<8x8x1xf32>
    %28 = vector.broadcast %27 : vector<8x8x1xf32> to vector<8x8x32xf32>
    %29 = arith.mulf %28, %0 : vector<8x8x32xf32>
    %cst_13 = arith.constant dense<0.000000e+00> : vector<8x32xf32>
    %30 = vector.multi_reduction <add>, %29, %cst_13 [1] : vector<8x8x32xf32> to vector<8x32xf32>
    %c0_14 = arith.constant 0 : index
    %c0_15 = arith.constant 0 : index
    %31 = vector.load %arg6[%c0_14, %c0_15] : memref<8x32xf32, #tpu.memory_space<vmem>>, vector<8x32xf32>
    tpu.vector_store %arg6[%c0_14, %c0_15], %30 {strides = array<i32>} : memref<8x32xf32, #tpu.memory_space<vmem>>, vector<8x32xf32>,
    %32 = vector.shape_cast %27 : vector<8x8x1xf32> to vector<8x8xf32>
    %c0_16 = arith.constant 0 : index
    %c0_17 = arith.constant 0 : index
    %33 = vector.load %arg7[%c0_16, %c0_17] : memref<8x8xf32, #tpu.memory_space<vmem>>, vector<8x8xf32>
    tpu.vector_store %arg7[%c0_16, %c0_17], %32 {strides = array<i32>} : memref<8x8xf32, #tpu.memory_space<vmem>>, vector<8x8xf32>,
    return
  }
  func.func @transform_0(%arg0: i32) -> (i32, i32, i32) {
    %c0_i32 = arith.constant 0 : i32
    %c0_i32_0 = arith.constant 0 : i32
    %c0_i32_1 = arith.constant 0 : i32
    return %arg0, %c0_i32, %c0_i32_0 : i32, i32, i32
  }
  func.func @transform_1(%arg0: i32) -> (i32, i32) {
    %c0_i32 = arith.constant 0 : i32
    %c0_i32_0 = arith.constant 0 : i32
    %c0_i32_1 = arith.constant 0 : i32
    return %c0_i32, %c0_i32_0 : i32, i32
  }
  func.func @transform_2(%arg0: i32) -> (i32, i32) {
    %c0_i32 = arith.constant 0 : i32
    %c0_i32_0 = arith.constant 0 : i32
    %c0_i32_1 = arith.constant 0 : i32
    return %c0_i32, %c0_i32_0 : i32, i32
  }
  func.func @transform_3(%arg0: i32) -> (i32, i32) {
    %c0_i32 = arith.constant 0 : i32
    %c0_i32_0 = arith.constant 0 : i32
    %c0_i32_1 = arith.constant 0 : i32
    return %c0_i32, %c0_i32_0 : i32, i32
  }
  func.func @transform_4(%arg0: i32) -> (i32, i32) {
    %c0_i32 = arith.constant 0 : i32
    %c0_i32_0 = arith.constant 0 : i32
    %c0_i32_1 = arith.constant 0 : i32
    return %c0_i32, %c0_i32_0 : i32, i32
  }
  func.func @transform_5(%arg0: i32) -> (i32, i32) {
    %c0_i32 = arith.constant 0 : i32
    %c0_i32_0 = arith.constant 0 : i32
    return %arg0, %c0_i32 : i32, i32
  }
  func.func @transform_6(%arg0: i32) -> (i32, i32) {
    %c0_i32 = arith.constant 0 : i32
    %c0_i32_0 = arith.constant 0 : i32
    return %arg0, %c0_i32 : i32, i32
  }
}

</mosaic_0001>

<llo_original>
// kernel: attentive_pooling.1
$region0: #{attentive_pooling.1}
  #allocation0 [shape = 'u32[]', space=smem, size = 0x4, offset = 0x4, fixed_abs, tag = 'smem constant byte address 0x4 - core index']
  #allocation1 [shape = 'u32[144,128]{1,0:T(1,128)}', space=vmem, size = 0x12000, scoped, tag = 'internal scratch']
  #allocation2 [shape = 'f32[1,1]{1,0:T(1,128)S(1)}', space=vmem, size = 0x200, scoped, tag = 'scoped memory for attentive_pooling.1']
  %s0 = inlined_call_operand.vmem [shape: f32[8,8,32], index: 0, kind: input, shape index: {}]
  %s1 = inlined_call_operand.vmem [shape: bf16[32,32], index: 1, kind: input, shape index: {}]
  %s2 = inlined_call_operand.vmem [shape: f32[1,32], index: 2, kind: input, shape index: {}]
  %s3 = inlined_call_operand.vmem [shape: f32[1,32], index: 3, kind: input, shape index: {}]
  %s4 = inlined_call_operand.<no memory space> [shape: f32[1,1], index: 4, kind: input, shape index: {}]
  %s5 = inlined_call_operand.vmem [shape: f32[8,32], index: 5, kind: output, shape index: {0}]
  %s6 = inlined_call_operand.vmem [shape: f32[8,8], index: 6, kind: output, shape index: {1}]
  %7 = xla_tuple %s5, %s6
  %s8 = sld [smem:[#allocation0]]
  $region38: #{attentive_pooling.1} parent=0
    _
  %s10 = ssub.s32 1, %s8
  %s11 = scalar_select 0, %s10, %s8
  %v12 = vstv %s4
  %13 = vst [vmem:[#allocation2] sm:$0x1] %v12
  // Predicated region
  $region2: #{attentive_pooling.1} parent=0 // pred_check
    _
  $region3: #{attentive_pooling.1} parent=0 // pred_check_branch
    %15 = sbr.rel (0) target = $region5
  $region4: #{attentive_pooling.1} parent=0 // pred_region
    _
  $region5: #{attentive_pooling.1} parent=0 // pred_fallthru
    _
  // Predicated region
  $region6: #{attentive_pooling.1} parent=0 // pred_check
    _
  $region7: #{attentive_pooling.1} parent=0 // pred_check_branch
    %17 = sbr.rel (0) target = $region9
  $region8: #{attentive_pooling.1} parent=0 // pred_region
    _
  $region9: #{attentive_pooling.1} parent=0 // pred_fallthru
    _
  // Predicated region
  $region10: #{attentive_pooling.1} parent=0 // pred_check
    _
  $region11: #{attentive_pooling.1} parent=0 // pred_check_branch
    %19 = sbr.rel (0) target = $region13
  $region12: #{attentive_pooling.1} parent=0 // pred_region
    _
  $region13: #{attentive_pooling.1} parent=0 // pred_fallthru
    _
  // Predicated region
  $region14: #{attentive_pooling.1} parent=0 // pred_check
    _
  $region15: #{attentive_pooling.1} parent=0 // pred_check_branch
    %21 = sbr.rel (0) target = $region17
  $region16: #{attentive_pooling.1} parent=0 // pred_region
    _
  $region17: #{attentive_pooling.1} parent=0 // pred_fallthru
    _
  // Predicated region
  $region18: #{attentive_pooling.1} parent=0 // pred_check
    _
  $region19: #{attentive_pooling.1} parent=0 // pred_check_branch
    %23 = sbr.rel (0) target = $region21
  $region20: #{attentive_pooling.1} parent=0 // pred_region
    _
  $region21: #{attentive_pooling.1} parent=0 // pred_fallthru
    _
  %v25 = vld [vmem:[%s0] sm:$0xff]
  %v26 = vld [vmem:[%s0 + $0x8] sm:$0xff]
  %v27 = vld [vmem:[%s0 + $0x10] sm:$0xff]
  %v28 = vld [vmem:[%s0 + $0x18] sm:$0xff]
  %v29 = vld [vmem:[%s0 + $0x20] sm:$0xff]
  %v30 = vld [vmem:[%s0 + $0x28] sm:$0xff]
  %v31 = vld [vmem:[%s0 + $0x30] sm:$0xff]
  %v32 = vld [vmem:[%s0 + $0x38] sm:$0xff]
  %v33 = vpack.c.bf16 %v26, %v25
  %v34 = vpack.c.bf16 %v28, %v27
  %v35 = vpack.c.bf16 %v30, %v29
  %v36 = vpack.c.bf16 %v32, %v31
  %v37 = vld [vmem:[%s1] sm:$0xf]
  %v38 = vld [vmem:[%s1 + $0x4] sm:$0xf]
  %v39 = vld [vmem:[%s1 + $0x8] sm:$0xf]
  %v40 = vld [vmem:[%s1 + $0xc] sm:$0xf]
  %v41 = vld [vmem:[%s2] sm:$0x1]
  %v43 = vlaneseq
  %v44 = vshrl.u32 %v43, 7
  %v45 = vsub.s32 0, %v44
  %v46 = vrot.slane %v41, %v45
  %v52 = vunpack.c.l.b16 %v37
  %v53 = vunpack.c.l.b16 %v38
  %v54 = vunpack.c.l.b16 %v39
  %v55 = vunpack.c.l.b16 %v40
  %v56 = vpack.c.b16 %v53, %v52
  %v57 = vpack.c.b16 %v55, %v54
  %vm60 = vcmask 261120
  %v62 = vsel %vm60, %v33, 0
  %v65 = vsel %vm60, %v34, 0
  %v68 = vsel %vm60, %v35, 0
  %v71 = vsel %vm60, %v36, 0
  %73 = vmatprep.subr.bf16.mxu0 0
  %74 = vmatpush1.bf16.msra.mxu0 0
  %75 = vmatprep.subr.bf16.mxu0 0
  %76 = vmatpush1.bf16.msra.mxu0 0
  %77 = vmatprep.subr.bf16.mxu0 0
  %78 = vmatpush1.bf16.msra.mxu0 0
  %79 = vmatprep.subr.bf16.mxu0 0
  %80 = vmatpush1.bf16.msra.mxu0 0
  %81 = vmatprep.subr.bf16.mxu0 0
  %82 = vmatpush1.bf16.msra.mxu0 0
  %83 = vmatprep.subr.bf16.mxu0 0
  %84 = vmatpush1.bf16.msra.mxu0 0
  %85 = vmatprep.subr.bf16.mxu0 0
  %86 = vmatpush1.bf16.msra.mxu0 %v57
  %87 = vmatprep.subr.bf16.mxu0 0
  %88 = vmatpush1.bf16.msra.mxu0 %v56
  %89 = vmatprep.subr.bf16.mxu0 0
  %90 = vmatpush2.bf16.msra.mxu0 0
  %91 = vmatprep.subr.bf16.mxu0 0
  %92 = vmatpush2.bf16.msra.mxu0 0
  %93 = vmatprep.subr.bf16.mxu0 0
  %94 = vmatpush2.bf16.msra.mxu0 0
  %95 = vmatprep.subr.bf16.mxu0 0
  %96 = vmatpush2.bf16.msra.mxu0 0
  %97 = vmatprep.subr.bf16.mxu0 0
  %98 = vmatpush2.bf16.msra.mxu0 0
  %99 = vmatprep.subr.bf16.mxu0 0
  %100 = vmatpush2.bf16.msra.mxu0 0
  %101 = vmatprep.subr.bf16.mxu0 0
  %102 = vmatpush2.bf16.msra.mxu0 0
  %103 = vmatprep.subr.bf16.mxu0 0
  %104 = vmatpush2.bf16.msra.mxu0 0
  %105 = vmatprep.mubr.bf16.mxu0 0
  %106 = vmatmul.mubr.bf16.gmra.mxu0 %v62
  %v107 = vpop.f32.mrf.mxu0
  %v108 = vadd.f32 %v46, %v107
  %v109 = vpop.f32.mrf.mxu0
  %v110 = vpop.f32.mrf.mxu0
  %v111 = vadd.f32 %v46, %v110
  %v112 = vpop.f32.mrf.mxu0
  %113 = vmatprep.mubr.bf16.mxu0 0
  %114 = vmatmul.mubr.bf16.gmra.mxu0 %v65
  %v115 = vpop.f32.mrf.mxu0
  %v116 = vadd.f32 %v46, %v115
  %v117 = vpop.f32.mrf.mxu0
  %v118 = vpop.f32.mrf.mxu0
  %v119 = vadd.f32 %v46, %v118
  %v120 = vpop.f32.mrf.mxu0
  %121 = vmatprep.mubr.bf16.mxu0 0
  %122 = vmatmul.mubr.bf16.gmra.mxu0 %v68
  %v123 = vpop.f32.mrf.mxu0
  %v124 = vadd.f32 %v46, %v123
  %v125 = vpop.f32.mrf.mxu0
  %v126 = vpop.f32.mrf.mxu0
  %v127 = vadd.f32 %v46, %v126
  %v128 = vpop.f32.mrf.mxu0
  %129 = vmatprep.mubr.bf16.mxu0 0
  %130 = vmatmul.mubr.bf16.gmra.mxu0 %v71
  %v131 = vpop.f32.mrf.mxu0
  %v132 = vadd.f32 %v46, %v131
  %v133 = vpop.f32.mrf.mxu0
  %v134 = vpop.f32.mrf.mxu0
  %v135 = vadd.f32 %v46, %v134
  %v136 = vpop.f32.mrf.mxu0
  %137 = vdwg.mxu0
  %v138 = vtanh.pop %v108
  %v139 = vtanh.pop %v111
  %v140 = vtanh.pop %v116
  %v141 = vtanh.pop %v119
  %v142 = vtanh.pop %v124
  %v143 = vtanh.pop %v127
  %v144 = vtanh.pop %v132
  %v145 = vtanh.pop %v135
  %v146 = vld [vmem:[%s3] sm:$0x1]
  %v148 = vlaneseq
  %v149 = vshrl.u32 %v148, 7
  %v150 = vsub.s32 0, %v149
  %v151 = vrot.slane %v146, %v150
  %v153 = vmul.f32 %v138, %v151
  %v154 = vmul.f32 %v139, %v151
  %v155 = vmul.f32 %v140, %v151
  %v156 = vmul.f32 %v141, %v151
  %v157 = vmul.f32 %v142, %v151
  %v158 = vmul.f32 %v143, %v151
  %v159 = vmul.f32 %v144, %v151
  %v160 = vmul.f32 %v145, %v151
  %v161 = vsel %vm60, %v153, 0.0
  %162 = vadd.xlane.f32.xlu0 %v161
  %v163 = vpop.xlane.xlu0 %162
  %v164 = vsel %vm60, %v154, 0.0
  %165 = vadd.xlane.f32.xlu0 %v164
  %v166 = vpop.xlane.xlu0 %165
  %v167 = vsel %vm60, %v155, 0.0
  %168 = vadd.xlane.f32.xlu0 %v167
  %v169 = vpop.xlane.xlu0 %168
  %v170 = vsel %vm60, %v156, 0.0
  %171 = vadd.xlane.f32.xlu0 %v170
  %v172 = vpop.xlane.xlu0 %171
  %v173 = vsel %vm60, %v157, 0.0
  %174 = vadd.xlane.f32.xlu0 %v173
  %v175 = vpop.xlane.xlu0 %174
  %v176 = vsel %vm60, %v158, 0.0
  %177 = vadd.xlane.f32.xlu0 %v176
  %v178 = vpop.xlane.xlu0 %177
  %v179 = vsel %vm60, %v159, 0.0
  %180 = vadd.xlane.f32.xlu0 %v179
  %v181 = vpop.xlane.xlu0 %180
  %v182 = vsel %vm60, %v160, 0.0
  %183 = vadd.xlane.f32.xlu0 %v182
  %v184 = vpop.xlane.xlu0 %183
  %v185 = vld [vmem:[#allocation2] sm:$0x1]
  %v187 = vlaneseq
  %v188 = vshrl.u32 %v187, 7
  %v189 = vsub.s32 0, %v188
  %v190 = vrot.slane %v185, %v189
  %v192 = vadd.f32 %v163, %v190
  %v193 = vadd.f32 %v166, %v190
  %v194 = vadd.f32 %v169, %v190
  %v195 = vadd.f32 %v172, %v190
  %v196 = vadd.f32 %v175, %v190
  %v197 = vadd.f32 %v178, %v190
  %v198 = vadd.f32 %v181, %v190
  %v199 = vadd.f32 %v184, %v190
  %vm200 = vcmask 7168
  %v201 = vsel %vm200, %v192, -inf
  %v202 = vrot.slane %v201, 4
  %v203 = vmax.f32 %v201, %v202
  %v204 = vrot.slane %v203, 2
  %v205 = vmax.f32 %v203, %v204
  %v206 = vrot.slane %v205, 1
  %v207 = vmax.f32 %v205, %v206
  %v208 = vsel %vm200, %v193, -inf
  %v209 = vrot.slane %v208, 4
  %v210 = vmax.f32 %v208, %v209
  %v211 = vrot.slane %v210, 2
  %v212 = vmax.f32 %v210, %v211
  %v213 = vrot.slane %v212, 1
  %v214 = vmax.f32 %v212, %v213
  %v215 = vsel %vm200, %v194, -inf
  %v216 = vrot.slane %v215, 4
  %v217 = vmax.f32 %v215, %v216
  %v218 = vrot.slane %v217, 2
  %v219 = vmax.f32 %v217, %v218
  %v220 = vrot.slane %v219, 1
  %v221 = vmax.f32 %v219, %v220
  %v222 = vsel %vm200, %v195, -inf
  %v223 = vrot.slane %v222, 4
  %v224 = vmax.f32 %v222, %v223
  %v225 = vrot.slane %v224, 2
  %v226 = vmax.f32 %v224, %v225
  %v227 = vrot.slane %v226, 1
  %v228 = vmax.f32 %v226, %v227
  %v229 = vsel %vm200, %v196, -inf
  %v230 = vrot.slane %v229, 4
  %v231 = vmax.f32 %v229, %v230
  %v232 = vrot.slane %v231, 2
  %v233 = vmax.f32 %v231, %v232
  %v234 = vrot.slane %v233, 1
  %v235 = vmax.f32 %v233, %v234
  %v236 = vsel %vm200, %v197, -inf
  %v237 = vrot.slane %v236, 4
  %v238 = vmax.f32 %v236, %v237
  %v239 = vrot.slane %v238, 2
  %v240 = vmax.f32 %v238, %v239
  %v241 = vrot.slane %v240, 1
  %v242 = vmax.f32 %v240, %v241
  %v243 = vsel %vm200, %v198, -inf
  %v244 = vrot.slane %v243, 4
  %v245 = vmax.f32 %v243, %v244
  %v246 = vrot.slane %v245, 2
  %v247 = vmax.f32 %v245, %v246
  %v248 = vrot.slane %v247, 1
  %v249 = vmax.f32 %v247, %v248
  %v250 = vsel %vm200, %v199, -inf
  %v251 = vrot.slane %v250, 4
  %v252 = vmax.f32 %v250, %v251
  %v253 = vrot.slane %v252, 2
  %v254 = vmax.f32 %v252, %v253
  %v255 = vrot.slane %v254, 1
  %v256 = vmax.f32 %v254, %v255
  %v257 = vsub.f32 %v192, %v207
  %v258 = vsub.f32 %v193, %v214
  %v259 = vsub.f32 %v194, %v221
  %v260 = vsub.f32 %v195, %v228
  %v261 = vsub.f32 %v196, %v235
  %v262 = vsub.f32 %v197, %v242
  %v263 = vsub.f32 %v198, %v249
  %v264 = vsub.f32 %v199, %v256
  %v265 = vmul.f32 %v257, 1.442695
  %v266 = vpow.pop %v265
  %v267 = vmul.f32 %v258, 1.442695
  %v268 = vpow.pop %v267
  %v269 = vmul.f32 %v259, 1.442695
  %v270 = vpow.pop %v269
  %v271 = vmul.f32 %v260, 1.442695
  %v272 = vpow.pop %v271
  %v273 = vmul.f32 %v261, 1.442695
  %v274 = vpow.pop %v273
  %v275 = vmul.f32 %v262, 1.442695
  %v276 = vpow.pop %v275
  %v277 = vmul.f32 %v263, 1.442695
  %v278 = vpow.pop %v277
  %v279 = vmul.f32 %v264, 1.442695
  %v280 = vpow.pop %v279
  %v281 = vsel %vm200, %v266, 0.0
  %v282 = vrot.slane %v281, 4
  %v283 = vadd.f32 %v281, %v282
  %v284 = vrot.slane %v283, 2
  %v285 = vadd.f32 %v283, %v284
  %v286 = vrot.slane %v285, 1
  %v287 = vadd.f32 %v285, %v286
  %v288 = vsel %vm200, %v268, 0.0
  %v289 = vrot.slane %v288, 4
  %v290 = vadd.f32 %v288, %v289
  %v291 = vrot.slane %v290, 2
  %v292 = vadd.f32 %v290, %v291
  %v293 = vrot.slane %v292, 1
  %v294 = vadd.f32 %v292, %v293
  %v295 = vsel %vm200, %v270, 0.0
  %v296 = vrot.slane %v295, 4
  %v297 = vadd.f32 %v295, %v296
  %v298 = vrot.slane %v297, 2
  %v299 = vadd.f32 %v297, %v298
  %v300 = vrot.slane %v299, 1
  %v301 = vadd.f32 %v299, %v300
  %v302 = vsel %vm200, %v272, 0.0
  %v303 = vrot.slane %v302, 4
  %v304 = vadd.f32 %v302, %v303
  %v305 = vrot.slane %v304, 2
  %v306 = vadd.f32 %v304, %v305
  %v307 = vrot.slane %v306, 1
  %v308 = vadd.f32 %v306, %v307
  %v309 = vsel %vm200, %v274, 0.0
  %v310 = vrot.slane %v309, 4
  %v311 = vadd.f32 %v309, %v310
  %v312 = vrot.slane %v311, 2
  %v313 = vadd.f32 %v311, %v312
  %v314 = vrot.slane %v313, 1
  %v315 = vadd.f32 %v313, %v314
  %v316 = vsel %vm200, %v276, 0.0
  %v317 = vrot.slane %v316, 4
  %v318 = vadd.f32 %v316, %v317
  %v319 = vrot.slane %v318, 2
  %v320 = vadd.f32 %v318, %v319
  %v321 = vrot.slane %v320, 1
  %v322 = vadd.f32 %v320, %v321
  %v323 = vsel %vm200, %v278, 0.0
  %v324 = vrot.slane %v323, 4
  %v325 = vadd.f32 %v323, %v324
  %v326 = vrot.slane %v325, 2
  %v327 = vadd.f32 %v325, %v326
  %v328 = vrot.slane %v327, 1
  %v329 = vadd.f32 %v327, %v328
  %v330 = vsel %vm200, %v280, 0.0
  %v331 = vrot.slane %v330, 4
  %v332 = vadd.f32 %v330, %v331
  %v333 = vrot.slane %v332, 2
  %v334 = vadd.f32 %v332, %v333
  %v335 = vrot.slane %v334, 1
  %v336 = vadd.f32 %v334, %v335
  %v337 = vrcp.pop %v287
  %v338 = vrcp.pop %v294
  %v339 = vrcp.pop %v301
  %v340 = vrcp.pop %v308
  %v341 = vrcp.pop %v315
  %v342 = vrcp.pop %v322
  %v343 = vrcp.pop %v329
  %v344 = vrcp.pop %v336
  %v345 = vmul.f32 %v266, %v337
  %v346 = vmul.f32 %v268, %v338
  %v347 = vmul.f32 %v270, %v339
  %v348 = vmul.f32 %v272, %v340
  %v349 = vmul.f32 %v274, %v341
  %v350 = vmul.f32 %v276, %v342
  %v351 = vmul.f32 %v278, %v343
  %v352 = vmul.f32 %v280, %v344
  %354 = vset.pattern.permute.xlu0 0
  %355 = vperm.xlu0 %354, %v345
  %v356 = vpop.permute.xlu0 %355
  %359 = vset.pattern.permute.xlu0 0
  %360 = vperm.xlu0 %359, %v346
  %v361 = vpop.permute.xlu0 %360
  %364 = vset.pattern.permute.xlu0 0
  %365 = vperm.xlu0 %364, %v347
  %v366 = vpop.permute.xlu0 %365
  %369 = vset.pattern.permute.xlu0 0
  %370 = vperm.xlu0 %369, %v348
  %v371 = vpop.permute.xlu0 %370
  %374 = vset.pattern.permute.xlu0 0
  %375 = vperm.xlu0 %374, %v349
  %v376 = vpop.permute.xlu0 %375
  %379 = vset.pattern.permute.xlu0 0
  %380 = vperm.xlu0 %379, %v350
  %v381 = vpop.permute.xlu0 %380
  %384 = vset.pattern.permute.xlu0 0
  %385 = vperm.xlu0 %384, %v351
  %v386 = vpop.permute.xlu0 %385
  %389 = vset.pattern.permute.xlu0 0
  %390 = vperm.xlu0 %389, %v352
  %v391 = vpop.permute.xlu0 %390
  %v393 = vmul.f32 %v356, %v25
  %v394 = vmul.f32 %v361, %v26
  %v395 = vmul.f32 %v366, %v27
  %v396 = vmul.f32 %v371, %v28
  %v397 = vmul.f32 %v376, %v29
  %v398 = vmul.f32 %v381, %v30
  %v399 = vmul.f32 %v386, %v31
  %v400 = vmul.f32 %v391, %v32
  %v401 = vsel %vm60, %v393, 0.0
  %v402 = vrot.slane %v401, 4
  %v403 = vadd.f32 %v401, %v402
  %v404 = vrot.slane %v403, 2
  %v405 = vadd.f32 %v403, %v404
  %v406 = vrot.slane %v405, 1
  %v407 = vadd.f32 %v405, %v406
  %v408 = vsel %vm60, %v394, 0.0
  %v409 = vrot.slane %v408, 4
  %v410 = vadd.f32 %v408, %v409
  %v411 = vrot.slane %v410, 2
  %v412 = vadd.f32 %v410, %v411
  %v413 = vrot.slane %v412, 1
  %v414 = vadd.f32 %v412, %v413
  %v415 = vsel %vm60, %v395, 0.0
  %v416 = vrot.slane %v415, 4
  %v417 = vadd.f32 %v415, %v416
  %v418 = vrot.slane %v417, 2
  %v419 = vadd.f32 %v417, %v418
  %v420 = vrot.slane %v419, 1
  %v421 = vadd.f32 %v419, %v420
  %v422 = vsel %vm60, %v396, 0.0
  %v423 = vrot.slane %v422, 4
  %v424 = vadd.f32 %v422, %v423
  %v425 = vrot.slane %v424, 2
  %v426 = vadd.f32 %v424, %v425
  %v427 = vrot.slane %v426, 1
  %v428 = vadd.f32 %v426, %v427
  %v429 = vsel %vm60, %v397, 0.0
  %v430 = vrot.slane %v429, 4
  %v431 = vadd.f32 %v429, %v430
  %v432 = vrot.slane %v431, 2
  %v433 = vadd.f32 %v431, %v432
  %v434 = vrot.slane %v433, 1
  %v435 = vadd.f32 %v433, %v434
  %v436 = vsel %vm60, %v398, 0.0
  %v437 = vrot.slane %v436, 4
  %v438 = vadd.f32 %v436, %v437
  %v439 = vrot.slane %v438, 2
  %v440 = vadd.f32 %v438, %v439
  %v441 = vrot.slane %v440, 1
  %v442 = vadd.f32 %v440, %v441
  %v443 = vsel %vm60, %v399, 0.0
  %v444 = vrot.slane %v443, 4
  %v445 = vadd.f32 %v443, %v444
  %v446 = vrot.slane %v445, 2
  %v447 = vadd.f32 %v445, %v446
  %v448 = vrot.slane %v447, 1
  %v449 = vadd.f32 %v447, %v448
  %v450 = vsel %vm60, %v400, 0.0
  %v451 = vrot.slane %v450, 4
  %v452 = vadd.f32 %v450, %v451
  %v453 = vrot.slane %v452, 2
  %v454 = vadd.f32 %v452, %v453
  %v455 = vrot.slane %v454, 1
  %v456 = vadd.f32 %v454, %v455
  %vm465 = vcmask 1041409
  %v466 = vsel %vm465, %v414, %v407
  %vm467 = vcmask 1042434
  %v468 = vsel %vm467, %v421, %v466
  %vm469 = vcmask 1043459
  %v470 = vsel %vm469, %v428, %v468
  %vm471 = vcmask 1044484
  %v472 = vsel %vm471, %v435, %v470
  %vm473 = vcmask 1045509
  %v474 = vsel %vm473, %v442, %v472
  %vm475 = vcmask 1046534
  %v476 = vsel %vm475, %v449, %v474
  %vm477 = vcmask 1047559
  %v478 = vsel %vm477, %v456, %v476
  %480 = vst.msk [vmem:[%s5] sm:$0xff] %vm60, %v478
  %v481 = vlaneseq
  %v482 = vand.u32 %v481, 127
  %v483 = vlaneseq
  %v484 = vshrl.u32 %v483, 7
  %v485 = vsub.s32 %v482, %v484
  %v486 = vrot.slane %v356, %v485
  %v487 = vlaneseq
  %v488 = vshrl.u32 %v487, 7
  %v489 = vsub.s32 %v482, %v488
  %v490 = vrot.slane %v361, %v489
  %v491 = vlaneseq
  %v492 = vshrl.u32 %v491, 7
  %v493 = vsub.s32 %v482, %v492
  %v494 = vrot.slane %v366, %v493
  %v495 = vlaneseq
  %v496 = vshrl.u32 %v495, 7
  %v497 = vsub.s32 %v482, %v496
  %v498 = vrot.slane %v371, %v497
  %v499 = vlaneseq
  %v500 = vshrl.u32 %v499, 7
  %v501 = vsub.s32 %v482, %v500
  %v502 = vrot.slane %v376, %v501
  %v503 = vlaneseq
  %v504 = vshrl.u32 %v503, 7
  %v505 = vsub.s32 %v482, %v504
  %v506 = vrot.slane %v381, %v505
  %v507 = vlaneseq
  %v508 = vshrl.u32 %v507, 7
  %v509 = vsub.s32 %v482, %v508
  %v510 = vrot.slane %v386, %v509
  %v511 = vlaneseq
  %v512 = vshrl.u32 %v511, 7
  %v513 = vsub.s32 %v482, %v512
  %v514 = vrot.slane %v391, %v513
  %v515 = vsel %vm465, %v490, %v486
  %v516 = vsel %vm467, %v494, %v515
  %v517 = vsel %vm469, %v498, %v516
  %v518 = vsel %vm471, %v502, %v517
  %v519 = vsel %vm473, %v506, %v518
  %v520 = vsel %vm475, %v510, %v519
  %v521 = vsel %vm477, %v514, %v520
  %vm523 = vcmask 64512
  %524 = vst.msk [vmem:[%s6] sm:$0xff] %vm523, %v521
  // Predicated region
  $region22: #{attentive_pooling.1} parent=0 // pred_check
    _
  $region23: #{attentive_pooling.1} parent=0 // pred_check_branch
    %526 = sbr.rel (0) target = $region25
  $region24: #{attentive_pooling.1} parent=0 // pred_region
    _
  $region25: #{attentive_pooling.1} parent=0 // pred_fallthru
    _
  // Predicated region
  $region26: #{attentive_pooling.1} parent=0 // pred_check
    _
  $region27: #{attentive_pooling.1} parent=0 // pred_check_branch
    %528 = sbr.rel (0) target = $region29
  $region28: #{attentive_pooling.1} parent=0 // pred_region
    _
  $region29: #{attentive_pooling.1} parent=0 // pred_fallthru
    _
  // Predicated region
  $region30: #{attentive_pooling.1} parent=0 // pred_check
    _
  $region31: #{attentive_pooling.1} parent=0 // pred_check_branch
    %530 = sbr.rel (0) target = $region33
  $region32: #{attentive_pooling.1} parent=0 // pred_region
    _
  $region33: #{attentive_pooling.1} parent=0 // pred_fallthru
    _
  // Predicated region
  $region34: #{attentive_pooling.1} parent=0 // pred_check
    _
  $region35: #{attentive_pooling.1} parent=0 // pred_check_branch
    %532 = sbr.rel (0) target = $region37
  $region36: #{attentive_pooling.1} parent=0 // pred_region
    _
  $region37: #{attentive_pooling.1} parent=0 // pred_fallthru
    _

</llo_original>
